<compile_context>
chip_gen: v7x
topology: tpu7x:2x2x1
jax: 0.10.0
libtpu: 0.0.40
codegen_flags: <defaults>
</compile_context>

<pallas_src>
import functools
import math

import jax
import jax.numpy as jnp
from jax import lax
from jax.experimental import pallas as pl
from jax.experimental.pallas import tpu as pltpu


def _round_up(x, m):
    return ((x + m - 1) // m) * m


# ----------------------------------------------------------------------------
# Kernel: streaming sum over seq -> (fc * 1/S + b) -> GELU(erf) -> classifier
# ----------------------------------------------------------------------------
def _emotion_head_kernel(h_ref, w1_ref, b1_ref, w2_ref, b2_ref, out_ref,
                         acc_ref, *, inv_seq_len):
    s = pl.program_id(1)                       # seq tile index (reduction axis)

    @pl.when(s == 0)
    def _():
        acc_ref[...] = jnp.zeros_like(acc_ref)

    h = h_ref[...]                             # [Bt, St, D]
    if h.dtype != jnp.float32:                 # cast elided when already f32
        h = h.astype(jnp.float32)
    # Sublane (seq) reduce uses the XLU slot; running sum kept in f32 scratch.
    acc_ref[...] += jnp.sum(h, axis=1)         # [Bt, D]

    @pl.when(s == pl.num_programs(1) - 1)
    def _():
        # Mean fused into the matmul epilogue:
        #   (sum_s h / S) @ W1 + b1 == (sum_s h @ W1) * (1/S) + b1
        # so the divide lands on the small [Bt, H] tensor.
        x = jnp.dot(acc_ref[...], w1_ref[...],
                    preferred_element_type=jnp.float32)
        x = x * inv_seq_len + b1_ref[...]
        # F.gelu default = exact erf formulation (EUP handles erf/exp path).
        x = 0.5 * x * (1.0 + lax.erf(x * (1.0 / math.sqrt(2.0))))
        y = jnp.dot(x, w2_ref[...], preferred_element_type=jnp.float32)
        y = y + b2_ref[...]
        out_ref[...] = y.astype(out_ref.dtype)   # lane-dense (C padded to 128)


def _pick_seq_tile(S, batch_tile, D, bytes_per_elem, vmem_budget_bytes):
    """Largest divisor of S (multiple of 8, or S itself) whose double-buffered
    input block fits the VMEM budget."""
    best = None
    for cand in range(S, 0, -1):
        if S % cand != 0:
            continue
        if cand != S and cand % 8 != 0:
            continue
        blk_bytes = 2 * batch_tile * cand * D * bytes_per_elem   # double buffer
        if blk_bytes <= vmem_budget_bytes:
            best = cand
            break
    if best is None:
        # Fall back to the smallest legal tile (8, or full S if S < 8 / prime).
        best = 8 if S % 8 == 0 else S
    return best


def emotion_head(last_hidden_state, w_fc, b_fc, w_cls, b_cls,
                 *, batch_tile=None, seq_tile=None,
                 vmem_budget_bytes=16 * 1024 * 1024):
    """mean(1) -> fc -> gelu -> classifier, seq-streamed through VMEM."""
    B, S, D = last_hidden_state.shape
    H = w_fc.shape[1]
    C = w_cls.shape[1]

    # ---- lane-dense padding of the small weight/bias/output dims (zeros) ----
    H_PAD = _round_up(H, 128)
    C_PAD = _round_up(C, 128)
    w1 = w_fc if H_PAD == H else jnp.pad(w_fc, ((0, 0), (0, H_PAD - H)))
    b1 = b_fc.reshape(1, H)
    if H_PAD != H:
        b1 = jnp.pad(b1, ((0, 0), (0, H_PAD - H)))
    w2 = w_cls if (H_PAD == H and C_PAD == C) else jnp.pad(
        w_cls, ((0, H_PAD - H), (0, C_PAD - C)))
    b2 = b_cls.reshape(1, C)
    if C_PAD != C:
        b2 = jnp.pad(b2, ((0, 0), (0, C_PAD - C)))

    # ---- tiling (block last-two dims must be multiples of (8,128) or full) ----
    if batch_tile is None:
        batch_tile = B if (B <= 128 or B % 128 != 0) else 128
    if seq_tile is None:
        seq_tile = _pick_seq_tile(S, batch_tile, D,
                                  last_hidden_state.dtype.itemsize,
                                  vmem_budget_bytes)
    assert B % batch_tile == 0 and S % seq_tile == 0
    assert batch_tile == B or batch_tile % 8 == 0
    assert seq_tile == S or seq_tile % 8 == 0

    grid = (B // batch_tile, S // seq_tile)   # batch parallel, seq (reduce) last
    kernel = functools.partial(_emotion_head_kernel, inv_seq_len=1.0 / S)

    out_padded = pl.pallas_call(
        kernel,
        out_shape=jax.ShapeDtypeStruct((B, C_PAD), jnp.float32),
        grid=grid,
        in_specs=[
            pl.BlockSpec((batch_tile, seq_tile, D), lambda b, s: (b, s, 0)),
            # Constant block indices -> weights/biases stay resident in VMEM.
            pl.BlockSpec((D, H_PAD), lambda b, s: (0, 0)),
            pl.BlockSpec((1, H_PAD), lambda b, s: (0, 0)),
            pl.BlockSpec((H_PAD, C_PAD), lambda b, s: (0, 0)),
            pl.BlockSpec((1, C_PAD), lambda b, s: (0, 0)),
        ],
        # Same output block across the seq axis -> resident, written at s==last.
        out_specs=pl.BlockSpec((batch_tile, C_PAD), lambda b, s: (b, 0)),
        scratch_shapes=[pltpu.VMEM((batch_tile, D), jnp.float32)],
        compiler_params=pltpu.CompilerParams(
            dimension_semantics=("parallel", "arbitrary"),
            vmem_limit_bytes=64 * 1024 * 1024),
    )(last_hidden_state, w1, b1, w2, b2)

    return out_padded[:, :C] if C_PAD != C else out_padded


# ----------------------------------------------------------------------------
# Synthetic "text_encoder": deterministic embedding lookup -> [B, S, D].
# The real module wraps a pretrained transformer (out of scope here).
# TODO(synk): replace the embedding-lookup stand-in with a real transformer
#             encoder and fuse the gather / mean-pool into its last kernel
#             (PrefetchScalarGridSpec + pl.Element row-gather) to avoid the
#             [B,S,D] HBM round-trip at scale.
# ----------------------------------------------------------------------------
def synthetic_text_encoder(input_ids, attention_mask, embedding_table):
    del attention_mask  # the reference module's pooling is an unmasked mean
    return jnp.take(embedding_table, input_ids, axis=0)  # [B, S, D]


@jax.jit
def text_emotion_model_forward(params, text_input_ids, text_attention_mask):
    h = synthetic_text_encoder(text_input_ids, text_attention_mask,
                               params["emb"])
    return emotion_head(h, params["w_fc"], params["b_fc"],
                        params["w_cls"], params["b_cls"])


if __name__ == "__main__":
    # Small but structure-exercising shapes (multiple seq tiles, 8-row batch).
    BATCH = 8
    SEQ = 64
    TEXT_ENCODER_DIM = 32            # args.text_encoder_dim
    HIDDEN = TEXT_ENCODER_DIM // 2   # 16
    NCLASS = 4                       # args.ncalss
    VOCAB = 64

    key = jax.random.PRNGKey(0)
    k_emb, k_w1, k_b1, k_w2, k_b2, k_ids = jax.random.split(key, 6)

    params = {
        "emb":  jax.random.normal(k_emb, (VOCAB, TEXT_ENCODER_DIM),
                                  dtype=jnp.float32) * 0.02,
        # nn.Linear-style init, weights stored pre-transposed for x @ W.
        "w_fc": jax.random.uniform(k_w1, (TEXT_ENCODER_DIM, HIDDEN),
                                   minval=-1.0, maxval=1.0,
                                   dtype=jnp.float32) / jnp.sqrt(TEXT_ENCODER_DIM),
        "b_fc": jax.random.uniform(k_b1, (HIDDEN,),
                                   minval=-1.0, maxval=1.0,
                                   dtype=jnp.float32) / jnp.sqrt(TEXT_ENCODER_DIM),
        "w_cls": jax.random.uniform(k_w2, (HIDDEN, NCLASS),
                                    minval=-1.0, maxval=1.0,
                                    dtype=jnp.float32) / jnp.sqrt(HIDDEN),
        "b_cls": jax.random.uniform(k_b2, (NCLASS,),
                                    minval=-1.0, maxval=1.0,
                                    dtype=jnp.float32) / jnp.sqrt(HIDDEN),
    }

    text_input_ids = jax.random.randint(k_ids, (BATCH, SEQ), 0, VOCAB,
                                        dtype=jnp.int32)
    text_attention_mask = jnp.ones((BATCH, SEQ), dtype=jnp.int32)

    out = text_emotion_model_forward(params, text_input_ids,
                                     text_attention_mask)
    out = jax.block_until_ready(out)

    # Pure-JAX reference of the head (mean -> fc -> gelu -> classifier).
    h_ref = jnp.take(params["emb"], text_input_ids, axis=0)
    pooled = h_ref.mean(axis=1)
    x_ref = pooled @ params["w_fc"] + params["b_fc"]
    x_ref = 0.5 * x_ref * (1.0 + lax.erf(x_ref / jnp.sqrt(2.0)))
    ref = x_ref @ params["w_cls"] + params["b_cls"]

    assert out.shape == (BATCH, NCLASS), out.shape
    assert jnp.allclose(out, ref, atol=1e-5, rtol=1e-5), (out, ref)

    print("KERNEL_OK")
</pallas_src>

<mosaic_0001>
module attributes {stable_mosaic.version = 11 : i64} {
  func.func @_emotion_head_kernel(%arg0: i32, %arg1: i32, %arg2: memref<8x64x32xf32, #tpu.memory_space<vmem>>, %arg3: memref<32x128xf32, #tpu.memory_space<vmem>>, %arg4: memref<1x128xf32, #tpu.memory_space<vmem>>, %arg5: memref<128x128xf32, #tpu.memory_space<vmem>>, %arg6: memref<1x128xf32, #tpu.memory_space<vmem>>, %arg7: memref<8x128xf32, #tpu.memory_space<vmem>>, %arg8: memref<8x32xf32, #tpu.memory_space<vmem>>) attributes {dimension_semantics = [#tpu.dimension_semantics<parallel>, #tpu.dimension_semantics<arbitrary>], iteration_bounds = array<i64: 1, 1>, scalar_prefetch = 0 : i64, scratch_operands = 1 : i64, tpu.core_type = #tpu.core_type<tc>, window_params = [{transform_indices = @transform_0, window_bounds = array<i64: 8, 64, 32>}, {pipeline_mode = #tpu.pipeline_mode<synchronous>, transform_indices = @transform_1, window_bounds = array<i64: 32, 128>}, {pipeline_mode = #tpu.pipeline_mode<synchronous>, transform_indices = @transform_2, window_bounds = array<i64: 1, 128>}, {pipeline_mode = #tpu.pipeline_mode<synchronous>, transform_indices = @transform_3, window_bounds = array<i64: 128, 128>}, {pipeline_mode = #tpu.pipeline_mode<synchronous>, transform_indices = @transform_4, window_bounds = array<i64: 1, 128>}, {transform_indices = @transform_5, window_bounds = array<i64: 8, 128>}]} {
    %c0_i32 = arith.constant 0 : i32
    %0 = arith.cmpi eq, %arg1, %c0_i32 : i32
    %1 = arith.extui %0 : i1 to i32
    %c0_i32_0 = arith.constant 0 : i32
    %2 = arith.cmpi ne, %1, %c0_i32_0 : i32
    scf.if %2 {
      %cst_9 = arith.constant 0.000000e+00 : f32
      %11 = vector.broadcast %cst_9 : f32 to vector<8x32xf32>
      %c0_10 = arith.constant 0 : index
      %c0_11 = arith.constant 0 : index
      %12 = vector.load %arg8[%c0_10, %c0_11] : memref<8x32xf32, #tpu.memory_space<vmem>>, vector<8x32xf32>
      tpu.vector_store %arg8[%c0_10, %c0_11], %11 {strides = array<i32>} : memref<8x32xf32, #tpu.memory_space<vmem>>, vector<8x32xf32>,
    } else {
    }
    %c0 = arith.constant 0 : index
    %c0_1 = arith.constant 0 : index
    %c0_2 = arith.constant 0 : index
    %3 = vector.load %arg2[%c0, %c0_1, %c0_2] : memref<8x64x32xf32, #tpu.memory_space<vmem>>, vector<8x64x32xf32>
    %c0_3 = arith.constant 0 : index
    %c0_4 = arith.constant 0 : index
    %4 = vector.load %arg8[%c0_3, %c0_4] : memref<8x32xf32, #tpu.memory_space<vmem>>, vector<8x32xf32>
    %cst = arith.constant dense<0.000000e+00> : vector<8x32xf32>
    %5 = vector.multi_reduction <add>, %3, %cst [1] : vector<8x64x32xf32> to vector<8x32xf32>
    %6 = arith.addf %4, %5 : vector<8x32xf32>
    %c0_5 = arith.constant 0 : index
    %c0_6 = arith.constant 0 : index
    %7 = vector.load %arg8[%c0_5, %c0_6] : memref<8x32xf32, #tpu.memory_space<vmem>>, vector<8x32xf32>
    tpu.vector_store %arg8[%c0_5, %c0_6], %6 {strides = array<i32>} : memref<8x32xf32, #tpu.memory_space<vmem>>, vector<8x32xf32>,
    %c0_i32_7 = arith.constant 0 : i32
    %8 = arith.cmpi eq, %arg1, %c0_i32_7 : i32
    %9 = arith.extui %8 : i1 to i32
    %c0_i32_8 = arith.constant 0 : i32
    %10 = arith.cmpi ne, %9, %c0_i32_8 : i32
    scf.if %10 {
      %c0_9 = arith.constant 0 : index
      %c0_10 = arith.constant 0 : index
      %11 = vector.load %arg8[%c0_9, %c0_10] : memref<8x32xf32, #tpu.memory_space<vmem>>, vector<8x32xf32>
      %c0_11 = arith.constant 0 : index
      %c0_12 = arith.constant 0 : index
      %12 = vector.load %arg3[%c0_11, %c0_12] : memref<32x128xf32, #tpu.memory_space<vmem>>, vector<32x128xf32>
      %cst_13 = arith.constant dense<0.000000e+00> : vector<8x128xf32>
      %13 = tpu.matmul %11, %12, %cst_13 {dimension_numbers = #tpu.dot_dimension_numbers<[1], [0], [0], [1], [0, 0, 1, 1], [], []>} : vector<8x32xf32>, vector<32x128xf32>, vector<8x128xf32> -> vector<8x128xf32>
      %cst_14 = arith.constant 1.562500e-02 : f32
      %14 = vector.broadcast %cst_14 : f32 to vector<8x128xf32>
      %15 = arith.mulf %13, %14 : vector<8x128xf32>
      %c0_15 = arith.constant 0 : index
      %c0_16 = arith.constant 0 : index
      %16 = vector.load %arg4[%c0_15, %c0_16] : memref<1x128xf32, #tpu.memory_space<vmem>>, vector<1x128xf32>
      %17 = vector.broadcast %16 : vector<1x128xf32> to vector<8x128xf32>
      %18 = arith.addf %15, %17 : vector<8x128xf32>
      %cst_17 = arith.constant 5.000000e-01 : f32
      %19 = vector.broadcast %cst_17 : f32 to vector<8x128xf32>
      %20 = arith.mulf %19, %18 : vector<8x128xf32>
      %cst_18 = arith.constant 0.707106769 : f32
      %21 = vector.broadcast %cst_18 : f32 to vector<8x128xf32>
      %22 = arith.mulf %18, %21 : vector<8x128xf32>
      %23 = math.erf %22 : vector<8x128xf32>
      %cst_19 = arith.constant 1.000000e+00 : f32
      %24 = vector.broadcast %cst_19 : f32 to vector<8x128xf32>
      %25 = arith.addf %24, %23 : vector<8x128xf32>
      %26 = arith.mulf %20, %25 : vector<8x128xf32>
      %c0_20 = arith.constant 0 : index
      %c0_21 = arith.constant 0 : index
      %27 = vector.load %arg5[%c0_20, %c0_21] : memref<128x128xf32, #tpu.memory_space<vmem>>, vector<128x128xf32>
      %cst_22 = arith.constant dense<0.000000e+00> : vector<8x128xf32>
      %28 = tpu.matmul %26, %27, %cst_22 {dimension_numbers = #tpu.dot_dimension_numbers<[1], [0], [0], [1], [0, 0, 1, 1], [], []>} : vector<8x128xf32>, vector<128x128xf32>, vector<8x128xf32> -> vector<8x128xf32>
      %c0_23 = arith.constant 0 : index
      %c0_24 = arith.constant 0 : index
      %29 = vector.load %arg6[%c0_23, %c0_24] : memref<1x128xf32, #tpu.memory_space<vmem>>, vector<1x128xf32>
      %30 = vector.broadcast %29 : vector<1x128xf32> to vector<8x128xf32>
      %31 = arith.addf %28, %30 : vector<8x128xf32>
      %c0_25 = arith.constant 0 : index
      %c0_26 = arith.constant 0 : index
      %32 = vector.load %arg7[%c0_25, %c0_26] : memref<8x128xf32, #tpu.memory_space<vmem>>, vector<8x128xf32>
      tpu.vector_store %arg7[%c0_25, %c0_26], %31 {strides = array<i32>} : memref<8x128xf32, #tpu.memory_space<vmem>>, vector<8x128xf32>,
    } else {
    }
    return
  }
  func.func @transform_0(%arg0: i32, %arg1: i32) -> (i32, i32, i32) {
    %c0_i32 = arith.constant 0 : i32
    %c0_i32_0 = arith.constant 0 : i32
    return %arg0, %arg1, %c0_i32 : i32, i32, i32
  }
  func.func @transform_1(%arg0: i32, %arg1: i32) -> (i32, i32) {
    %c0_i32 = arith.constant 0 : i32
    %c0_i32_0 = arith.constant 0 : i32
    %c0_i32_1 = arith.constant 0 : i32
    return %c0_i32, %c0_i32_0 : i32, i32
  }
  func.func @transform_2(%arg0: i32, %arg1: i32) -> (i32, i32) {
    %c0_i32 = arith.constant 0 : i32
    %c0_i32_0 = arith.constant 0 : i32
    %c0_i32_1 = arith.constant 0 : i32
    return %c0_i32, %c0_i32_0 : i32, i32
  }
  func.func @transform_3(%arg0: i32, %arg1: i32) -> (i32, i32) {
    %c0_i32 = arith.constant 0 : i32
    %c0_i32_0 = arith.constant 0 : i32
    %c0_i32_1 = arith.constant 0 : i32
    return %c0_i32, %c0_i32_0 : i32, i32
  }
  func.func @transform_4(%arg0: i32, %arg1: i32) -> (i32, i32) {
    %c0_i32 = arith.constant 0 : i32
    %c0_i32_0 = arith.constant 0 : i32
    %c0_i32_1 = arith.constant 0 : i32
    return %c0_i32, %c0_i32_0 : i32, i32
  }
  func.func @transform_5(%arg0: i32, %arg1: i32) -> (i32, i32) {
    %c0_i32 = arith.constant 0 : i32
    %c0_i32_0 = arith.constant 0 : i32
    return %arg0, %c0_i32 : i32, i32
  }
}

</mosaic_0001>

<llo_original>
// kernel: text_emotion_model_forward.1
$region0: #{text_emotion_model_forward.1}
  #allocation0 [shape = 'u32[]', space=smem, size = 0x4, offset = 0x4, fixed_abs, tag = 'smem constant byte address 0x4 - core index']
  #allocation1 [shape = 'u32[144,128]{1,0:T(1,128)}', space=vmem, size = 0x12000, scoped, tag = 'internal scratch']
  #allocation2 [shape = 'f32[8,32]{1,0:T(8,128)}', space=vmem, size = 0x1000, scoped, tag = 'scratch operand']
  %s0 = inlined_call_operand.hbm [shape: f32[8,64,32], index: 0, kind: input, shape index: {}]
  %s1 = inlined_call_operand.hbm [shape: f32[32,128], index: 1, kind: input, shape index: {}]
  %s2 = inlined_call_operand.hbm [shape: f32[1,128], index: 2, kind: input, shape index: {}]
  %s3 = inlined_call_operand.hbm [shape: f32[128,128], index: 3, kind: input, shape index: {}]
  %s4 = inlined_call_operand.hbm [shape: f32[1,128], index: 4, kind: input, shape index: {}]
  %s5 = inlined_call_operand.hbm [shape: f32[8,128], index: 5, kind: output, shape index: {}]
  %s6 = sld [smem:[#allocation0]]
  $region58: #{text_emotion_model_forward.1} parent=0
    _
  %s8 = ssub.s32 1, %s6
  %s9 = scalar_select 0, %s8, %s6
  $region1: #{text_emotion_model_forward.1} parent=0
    #allocation3 [shape = 'u8[262144]{0}', space=vmem, size = 0x40000, scoped, tag = 'input window, operand 0, single buffered']
    #allocation4 [shape = 's32[1]{0}', space=sflag, size = 0x4, scoped, tag = 'scoped memory for text_emotion_model_forward.1']
    #allocation5 [shape = 's32[1]{0}', space=sflag, size = 0x4, scoped, tag = 'scoped memory for text_emotion_model_forward.1']
    #allocation6 [shape = 'u8[16384]{0}', space=vmem, size = 0x4000, scoped, tag = 'input window, operand 1, single buffered']
    #allocation7 [shape = 's32[1]{0}', space=sflag, size = 0x4, scoped, tag = 'scoped memory for text_emotion_model_forward.1']
    #allocation8 [shape = 'u8[512]{0}', space=vmem, size = 0x400, scoped, tag = 'input window, operand 2, single buffered']
    #allocation9 [shape = 'u8[65536]{0}', space=vmem, size = 0x10000, scoped, tag = 'input window, operand 3, single buffered']
    #allocation10 [shape = 's32[1]{0}', space=sflag, size = 0x4, scoped, tag = 'scoped memory for text_emotion_model_forward.1']
    #allocation11 [shape = 'u8[512]{0}', space=vmem, size = 0x400, scoped, tag = 'input window, operand 4, single buffered']
    #allocation12 [shape = 'u8[4096]{0}', space=vmem, size = 0x1000, scoped, tag = 'output window, operand 0, single buffered']
    %10 = vsyncpa [#allocation4], 0
    %11 = vsyncpa [#allocation7], 0
    %12 = vsyncpa [#allocation10], 0
    %13 = vsyncpa [#allocation5], 0
    // Predicated region
    $region2: #{text_emotion_model_forward.1} parent=1 // pred_check
      _
    $region3: #{text_emotion_model_forward.1} parent=1 // pred_check_branch
      %15 = sbr.rel (0) target = $region5
    $region4: #{text_emotion_model_forward.1} parent=1 // pred_region
      %s17 = ssub.s32 8192, 8192
      %18 = vsyncadd [#allocation4], %s17
      %s19 = sshll.u32 [#allocation3], 4
      %s20 = int_to_ptr.vmem [resolvable:$true] %s19
      %25 = dma.hbm_to_vmem [thread:$0]  %s0, 8192, %s20, [#allocation4], 128, 128, 8
    $region5: #{text_emotion_model_forward.1} parent=1 // pred_fallthru
      _
    // Predicated region
    $region6: #{text_emotion_model_forward.1} parent=1 // pred_check
      _
    $region7: #{text_emotion_model_forward.1} parent=1 // pred_check_branch
      %27 = sbr.rel (0) target = $region9
    $region8: #{text_emotion_model_forward.1} parent=1 // pred_region
      %s29 = ssub.s32 512, 512
      %30 = vsyncadd [#allocation7], %s29
      %s31 = sshll.u32 [#allocation6], 4
      %s32 = int_to_ptr.vmem [resolvable:$true] %s31
      %37 = dma.hbm_to_vmem [thread:$0]  %s1, 512, %s32, [#allocation7], 128, 128, 8
    $region9: #{text_emotion_model_forward.1} parent=1 // pred_fallthru
      _
    // Predicated region
    $region10: #{text_emotion_model_forward.1} parent=1 // pred_check
      _
    $region11: #{text_emotion_model_forward.1} parent=1 // pred_check_branch
      %39 = sbr.rel (0) target = $region13
    $region12: #{text_emotion_model_forward.1} parent=1 // pred_region
      %s41 = ssub.s32 16, 16
      %42 = vsyncadd [#allocation7], %s41
      %s44 = sshll.u32 [#allocation8], 4
      %s45 = int_to_ptr.vmem [resolvable:$true] %s44
      %47 = dma.hbm_to_vmem [thread:$0]  %s2, 16, %s45, [#allocation7]
    $region13: #{text_emotion_model_forward.1} parent=1 // pred_fallthru
      _
    // Predicated region
    $region14: #{text_emotion_model_forward.1} parent=1 // pred_check
      _
    $region15: #{text_emotion_model_forward.1} parent=1 // pred_check_branch
      %49 = sbr.rel (0) target = $region17
    $region16: #{text_emotion_model_forward.1} parent=1 // pred_region
      %s51 = ssub.s32 2048, 2048
      %52 = vsyncadd [#allocation10], %s51
      %s53 = sshll.u32 [#allocation9], 4
      %s54 = int_to_ptr.vmem [resolvable:$true] %s53
      %59 = dma.hbm_to_vmem [thread:$0]  %s3, 2048, %s54, [#allocation10], 128, 128, 8
    $region17: #{text_emotion_model_forward.1} parent=1 // pred_fallthru
      _
    // Predicated region
    $region18: #{text_emotion_model_forward.1} parent=1 // pred_check
      _
    $region19: #{text_emotion_model_forward.1} parent=1 // pred_check_branch
      %61 = sbr.rel (0) target = $region21
    $region20: #{text_emotion_model_forward.1} parent=1 // pred_region
      %s63 = ssub.s32 16, 16
      %64 = vsyncadd [#allocation10], %s63
      %s66 = sshll.u32 [#allocation11], 4
      %s67 = int_to_ptr.vmem [resolvable:$true] %s66
      %69 = dma.hbm_to_vmem [thread:$0]  %s4, 16, %s67, [#allocation10]
    $region21: #{text_emotion_model_forward.1} parent=1 // pred_fallthru
      _
    // Predicated region
    $region22: #{text_emotion_model_forward.1} parent=1 // pred_check
      _
    $region23: #{text_emotion_model_forward.1} parent=1 // pred_check_branch
      %71 = sbr.rel (0) target = $region25
    $region24: #{text_emotion_model_forward.1} parent=1 // pred_region
      %72 = dma.done [#allocation4], 8192
    $region25: #{text_emotion_model_forward.1} parent=1 // pred_fallthru
      _
    // Predicated region
    $region26: #{text_emotion_model_forward.1} parent=1 // pred_check
      _
    $region27: #{text_emotion_model_forward.1} parent=1 // pred_check_branch
      %74 = sbr.rel (0) target = $region29
    $region28: #{text_emotion_model_forward.1} parent=1 // pred_region
      %75 = dma.done [#allocation7], 512
    $region29: #{text_emotion_model_forward.1} parent=1 // pred_fallthru
      _
    // Predicated region
    $region30: #{text_emotion_model_forward.1} parent=1 // pred_check
      _
    $region31: #{text_emotion_model_forward.1} parent=1 // pred_check_branch
      %77 = sbr.rel (0) target = $region33
    $region32: #{text_emotion_model_forward.1} parent=1 // pred_region
      %78 = dma.done [#allocation7], 16
    $region33: #{text_emotion_model_forward.1} parent=1 // pred_fallthru
      _
    // Predicated region
    $region34: #{text_emotion_model_forward.1} parent=1 // pred_check
      _
    $region35: #{text_emotion_model_forward.1} parent=1 // pred_check_branch
      %80 = sbr.rel (0) target = $region37
    $region36: #{text_emotion_model_forward.1} parent=1 // pred_region
      %81 = dma.done [#allocation10], 2048
    $region37: #{text_emotion_model_forward.1} parent=1 // pred_fallthru
      _
    // Predicated region
    $region38: #{text_emotion_model_forward.1} parent=1 // pred_check
      _
    $region39: #{text_emotion_model_forward.1} parent=1 // pred_check_branch
      %83 = sbr.rel (0) target = $region41
    $region40: #{text_emotion_model_forward.1} parent=1 // pred_region
      %84 = dma.done [#allocation10], 16
    $region41: #{text_emotion_model_forward.1} parent=1 // pred_fallthru
      _
    %p85 = scmp.eq.s32.totalorder 0, 0
    // Predicated region
    $region42: #{text_emotion_model_forward.1} parent=1 // pred_check
      %p86 = pneg %p85
    $region43: #{text_emotion_model_forward.1} parent=1 // pred_check_branch
      %88 = sbr.rel (%p86) target = $region45
    $region44: #{text_emotion_model_forward.1} parent=1 // pred_region
      %vm89 = vcmask 261120
      %90 = vst.msk [vmem:[#allocation2] sm:$0xff] %vm89, 0.0
    $region45: #{text_emotion_model_forward.1} parent=1 // pred_fallthru
      _
    %v91 = vld [vmem:[#allocation3] sm:$0xff]
    %v92 = vld [vmem:[#allocation3 + $0x8] sm:$0xff]
    %v93 = vld [vmem:[#allocation3 + $0x10] sm:$0xff]
    %v94 = vld [vmem:[#allocation3 + $0x18] sm:$0xff]
    %v95 = vld [vmem:[#allocation3 + $0x20] sm:$0xff]
    %v96 = vld [vmem:[#allocation3 + $0x28] sm:$0xff]
    %v97 = vld [vmem:[#allocation3 + $0x30] sm:$0xff]
    %v98 = vld [vmem:[#allocation3 + $0x38] sm:$0xff]
    %v99 = vld [vmem:[#allocation3 + $0x40] sm:$0xff]
    %v100 = vld [vmem:[#allocation3 + $0x48] sm:$0xff]
    %v101 = vld [vmem:[#allocation3 + $0x50] sm:$0xff]
    %v102 = vld [vmem:[#allocation3 + $0x58] sm:$0xff]
    %v103 = vld [vmem:[#allocation3 + $0x60] sm:$0xff]
    %v104 = vld [vmem:[#allocation3 + $0x68] sm:$0xff]
    %v105 = vld [vmem:[#allocation3 + $0x70] sm:$0xff]
    %v106 = vld [vmem:[#allocation3 + $0x78] sm:$0xff]
    %v107 = vld [vmem:[#allocation3 + $0x80] sm:$0xff]
    %v108 = vld [vmem:[#allocation3 + $0x88] sm:$0xff]
    %v109 = vld [vmem:[#allocation3 + $0x90] sm:$0xff]
    %v110 = vld [vmem:[#allocation3 + $0x98] sm:$0xff]
    %v111 = vld [vmem:[#allocation3 + $0xa0] sm:$0xff]
    %v112 = vld [vmem:[#allocation3 + $0xa8] sm:$0xff]
    %v113 = vld [vmem:[#allocation3 + $0xb0] sm:$0xff]
    %v114 = vld [vmem:[#allocation3 + $0xb8] sm:$0xff]
    %v115 = vld [vmem:[#allocation3 + $0xc0] sm:$0xff]
    %v116 = vld [vmem:[#allocation3 + $0xc8] sm:$0xff]
    %v117 = vld [vmem:[#allocation3 + $0xd0] sm:$0xff]
    %v118 = vld [vmem:[#allocation3 + $0xd8] sm:$0xff]
    %v119 = vld [vmem:[#allocation3 + $0xe0] sm:$0xff]
    %v120 = vld [vmem:[#allocation3 + $0xe8] sm:$0xff]
    %v121 = vld [vmem:[#allocation3 + $0xf0] sm:$0xff]
    %v122 = vld [vmem:[#allocation3 + $0xf8] sm:$0xff]
    %v123 = vld [vmem:[#allocation3 + $0x100] sm:$0xff]
    %v124 = vld [vmem:[#allocation3 + $0x108] sm:$0xff]
    %v125 = vld [vmem:[#allocation3 + $0x110] sm:$0xff]
    %v126 = vld [vmem:[#allocation3 + $0x118] sm:$0xff]
    %v127 = vld [vmem:[#allocation3 + $0x120] sm:$0xff]
    %v128 = vld [vmem:[#allocation3 + $0x128] sm:$0xff]
    %v129 = vld [vmem:[#allocation3 + $0x130] sm:$0xff]
    %v130 = vld [vmem:[#allocation3 + $0x138] sm:$0xff]
    %v131 = vld [vmem:[#allocation3 + $0x140] sm:$0xff]
    %v132 = vld [vmem:[#allocation3 + $0x148] sm:$0xff]
    %v133 = vld [vmem:[#allocation3 + $0x150] sm:$0xff]
    %v134 = vld [vmem:[#allocation3 + $0x158] sm:$0xff]
    %v135 = vld [vmem:[#allocation3 + $0x160] sm:$0xff]
    %v136 = vld [vmem:[#allocation3 + $0x168] sm:$0xff]
    %v137 = vld [vmem:[#allocation3 + $0x170] sm:$0xff]
    %v138 = vld [vmem:[#allocation3 + $0x178] sm:$0xff]
    %v139 = vld [vmem:[#allocation3 + $0x180] sm:$0xff]
    %v140 = vld [vmem:[#allocation3 + $0x188] sm:$0xff]
    %v141 = vld [vmem:[#allocation3 + $0x190] sm:$0xff]
    %v142 = vld [vmem:[#allocation3 + $0x198] sm:$0xff]
    %v143 = vld [vmem:[#allocation3 + $0x1a0] sm:$0xff]
    %v144 = vld [vmem:[#allocation3 + $0x1a8] sm:$0xff]
    %v145 = vld [vmem:[#allocation3 + $0x1b0] sm:$0xff]
    %v146 = vld [vmem:[#allocation3 + $0x1b8] sm:$0xff]
    %v147 = vld [vmem:[#allocation3 + $0x1c0] sm:$0xff]
    %v148 = vld [vmem:[#allocation3 + $0x1c8] sm:$0xff]
    %v149 = vld [vmem:[#allocation3 + $0x1d0] sm:$0xff]
    %v150 = vld [vmem:[#allocation3 + $0x1d8] sm:$0xff]
    %v151 = vld [vmem:[#allocation3 + $0x1e0] sm:$0xff]
    %v152 = vld [vmem:[#allocation3 + $0x1e8] sm:$0xff]
    %v153 = vld [vmem:[#allocation3 + $0x1f0] sm:$0xff]
    %v154 = vld [vmem:[#allocation3 + $0x1f8] sm:$0xff]
    %v155 = vld [vmem:[#allocation2] sm:$0xff]
    %vm156 = vcmask 261120
    %v157 = vsel %vm156, %v91, 0.0
    %v158 = vsel %vm156, %v92, 0.0
    %v159 = vadd.f32 %v157, %v158
    %v160 = vsel %vm156, %v93, 0.0
    %v161 = vadd.f32 %v159, %v160
    %v162 = vsel %vm156, %v94, 0.0
    %v163 = vadd.f32 %v161, %v162
    %v164 = vsel %vm156, %v95, 0.0
    %v165 = vadd.f32 %v163, %v164
    %v166 = vsel %vm156, %v96, 0.0
    %v167 = vadd.f32 %v165, %v166
    %v168 = vsel %vm156, %v97, 0.0
    %v169 = vadd.f32 %v167, %v168
    %v170 = vsel %vm156, %v98, 0.0
    %v171 = vadd.f32 %v169, %v170
    %v172 = vrot.slane %v171, 4
    %v173 = vadd.f32 %v171, %v172
    %v174 = vrot.slane %v173, 2
    %v175 = vadd.f32 %v173, %v174
    %v176 = vrot.slane %v175, 1
    %v177 = vadd.f32 %v175, %v176
    %v178 = vsel %vm156, %v99, 0.0
    %v179 = vsel %vm156, %v100, 0.0
    %v180 = vadd.f32 %v178, %v179
    %v181 = vsel %vm156, %v101, 0.0
    %v182 = vadd.f32 %v180, %v181
    %v183 = vsel %vm156, %v102, 0.0
    %v184 = vadd.f32 %v182, %v183
    %v185 = vsel %vm156, %v103, 0.0
    %v186 = vadd.f32 %v184, %v185
    %v187 = vsel %vm156, %v104, 0.0
    %v188 = vadd.f32 %v186, %v187
    %v189 = vsel %vm156, %v105, 0.0
    %v190 = vadd.f32 %v188, %v189
    %v191 = vsel %vm156, %v106, 0.0
    %v192 = vadd.f32 %v190, %v191
    %v193 = vrot.slane %v192, 4
    %v194 = vadd.f32 %v192, %v193
    %v195 = vrot.slane %v194, 2
    %v196 = vadd.f32 %v194, %v195
    %v197 = vrot.slane %v196, 1
    %v198 = vadd.f32 %v196, %v197
    %v199 = vsel %vm156, %v107, 0.0
    %v200 = vsel %vm156, %v108, 0.0
    %v201 = vadd.f32 %v199, %v200
    %v202 = vsel %vm156, %v109, 0.0
    %v203 = vadd.f32 %v201, %v202
    %v204 = vsel %vm156, %v110, 0.0
    %v205 = vadd.f32 %v203, %v204
    %v206 = vsel %vm156, %v111, 0.0
    %v207 = vadd.f32 %v205, %v206
    %v208 = vsel %vm156, %v112, 0.0
    %v209 = vadd.f32 %v207, %v208
    %v210 = vsel %vm156, %v113, 0.0
    %v211 = vadd.f32 %v209, %v210
    %v212 = vsel %vm156, %v114, 0.0
    %v213 = vadd.f32 %v211, %v212
    %v214 = vrot.slane %v213, 4
    %v215 = vadd.f32 %v213, %v214
    %v216 = vrot.slane %v215, 2
    %v217 = vadd.f32 %v215, %v216
    %v218 = vrot.slane %v217, 1
    %v219 = vadd.f32 %v217, %v218
    %v220 = vsel %vm156, %v115, 0.0
    %v221 = vsel %vm156, %v116, 0.0
    %v222 = vadd.f32 %v220, %v221
    %v223 = vsel %vm156, %v117, 0.0
    %v224 = vadd.f32 %v222, %v223
    %v225 = vsel %vm156, %v118, 0.0
    %v226 = vadd.f32 %v224, %v225
    %v227 = vsel %vm156, %v119, 0.0
    %v228 = vadd.f32 %v226, %v227
    %v229 = vsel %vm156, %v120, 0.0
    %v230 = vadd.f32 %v228, %v229
    %v231 = vsel %vm156, %v121, 0.0
    %v232 = vadd.f32 %v230, %v231
    %v233 = vsel %vm156, %v122, 0.0
    %v234 = vadd.f32 %v232, %v233
    %v235 = vrot.slane %v234, 4
    %v236 = vadd.f32 %v234, %v235
    %v237 = vrot.slane %v236, 2
    %v238 = vadd.f32 %v236, %v237
    %v239 = vrot.slane %v238, 1
    %v240 = vadd.f32 %v238, %v239
    %v241 = vsel %vm156, %v123, 0.0
    %v242 = vsel %vm156, %v124, 0.0
    %v243 = vadd.f32 %v241, %v242
    %v244 = vsel %vm156, %v125, 0.0
    %v245 = vadd.f32 %v243, %v244
    %v246 = vsel %vm156, %v126, 0.0
    %v247 = vadd.f32 %v245, %v246
    %v248 = vsel %vm156, %v127, 0.0
    %v249 = vadd.f32 %v247, %v248
    %v250 = vsel %vm156, %v128, 0.0
    %v251 = vadd.f32 %v249, %v250
    %v252 = vsel %vm156, %v129, 0.0
    %v253 = vadd.f32 %v251, %v252
    %v254 = vsel %vm156, %v130, 0.0
    %v255 = vadd.f32 %v253, %v254
    %v256 = vrot.slane %v255, 4
    %v257 = vadd.f32 %v255, %v256
    %v258 = vrot.slane %v257, 2
    %v259 = vadd.f32 %v257, %v258
    %v260 = vrot.slane %v259, 1
    %v261 = vadd.f32 %v259, %v260
    %v262 = vsel %vm156, %v131, 0.0
    %v263 = vsel %vm156, %v132, 0.0
    %v264 = vadd.f32 %v262, %v263
    %v265 = vsel %vm156, %v133, 0.0
    %v266 = vadd.f32 %v264, %v265
    %v267 = vsel %vm156, %v134, 0.0
    %v268 = vadd.f32 %v266, %v267
    %v269 = vsel %vm156, %v135, 0.0
    %v270 = vadd.f32 %v268, %v269
    %v271 = vsel %vm156, %v136, 0.0
    %v272 = vadd.f32 %v270, %v271
    %v273 = vsel %vm156, %v137, 0.0
    %v274 = vadd.f32 %v272, %v273
    %v275 = vsel %vm156, %v138, 0.0
    %v276 = vadd.f32 %v274, %v275
    %v277 = vrot.slane %v276, 4
    %v278 = vadd.f32 %v276, %v277
    %v279 = vrot.slane %v278, 2
    %v280 = vadd.f32 %v278, %v279
    %v281 = vrot.slane %v280, 1
    %v282 = vadd.f32 %v280, %v281
    %v283 = vsel %vm156, %v139, 0.0
    %v284 = vsel %vm156, %v140, 0.0
    %v285 = vadd.f32 %v283, %v284
    %v286 = vsel %vm156, %v141, 0.0
    %v287 = vadd.f32 %v285, %v286
    %v288 = vsel %vm156, %v142, 0.0
    %v289 = vadd.f32 %v287, %v288
    %v290 = vsel %vm156, %v143, 0.0
    %v291 = vadd.f32 %v289, %v290
    %v292 = vsel %vm156, %v144, 0.0
    %v293 = vadd.f32 %v291, %v292
    %v294 = vsel %vm156, %v145, 0.0
    %v295 = vadd.f32 %v293, %v294
    %v296 = vsel %vm156, %v146, 0.0
    %v297 = vadd.f32 %v295, %v296
    %v298 = vrot.slane %v297, 4
    %v299 = vadd.f32 %v297, %v298
    %v300 = vrot.slane %v299, 2
    %v301 = vadd.f32 %v299, %v300
    %v302 = vrot.slane %v301, 1
    %v303 = vadd.f32 %v301, %v302
    %v304 = vsel %vm156, %v147, 0.0
    %v305 = vsel %vm156, %v148, 0.0
    %v306 = vadd.f32 %v304, %v305
    %v307 = vsel %vm156, %v149, 0.0
    %v308 = vadd.f32 %v306, %v307
    %v309 = vsel %vm156, %v150, 0.0
    %v310 = vadd.f32 %v308, %v309
    %v311 = vsel %vm156, %v151, 0.0
    %v312 = vadd.f32 %v310, %v311
    %v313 = vsel %vm156, %v152, 0.0
    %v314 = vadd.f32 %v312, %v313
    %v315 = vsel %vm156, %v153, 0.0
    %v316 = vadd.f32 %v314, %v315
    %v317 = vsel %vm156, %v154, 0.0
    %v318 = vadd.f32 %v316, %v317
    %v319 = vrot.slane %v318, 4
    %v320 = vadd.f32 %v318, %v319
    %v321 = vrot.slane %v320, 2
    %v322 = vadd.f32 %v320, %v321
    %v323 = vrot.slane %v322, 1
    %v324 = vadd.f32 %v322, %v323
    %vm333 = vcmask 1041409
    %v334 = vsel %vm333, %v198, %v177
    %vm335 = vcmask 1042434
    %v336 = vsel %vm335, %v219, %v334
    %vm337 = vcmask 1043459
    %v338 = vsel %vm337, %v240, %v336
    %vm339 = vcmask 1044484
    %v340 = vsel %vm339, %v261, %v338
    %vm341 = vcmask 1045509
    %v342 = vsel %vm341, %v282, %v340
    %vm343 = vcmask 1046534
    %v344 = vsel %vm343, %v303, %v342
    %vm345 = vcmask 1047559
    %v346 = vsel %vm345, %v324, %v344
    %v348 = vadd.f32 %v155, %v346
    %349 = vst.msk [vmem:[#allocation2] sm:$0xff] %vm156, %v348
    // Predicated region
    $region46: #{text_emotion_model_forward.1} parent=1 // pred_check
      %p350 = pneg %p85
    $region47: #{text_emotion_model_forward.1} parent=1 // pred_check_branch
      %352 = sbr.rel (%p350) target = $region49
    $region48: #{text_emotion_model_forward.1} parent=1 // pred_region
      %v353 = vld [vmem:[#allocation2] sm:$0xff]
      %v354 = vld [vmem:[#allocation6] sm:$0xff]
      %v355 = vld [vmem:[#allocation6 + $0x8] sm:$0xff]
      %v356 = vld [vmem:[#allocation6 + $0x10] sm:$0xff]
      %v357 = vld [vmem:[#allocation6 + $0x18] sm:$0xff]
      %v359 = vsel %vm156, %v353, 0
      %361 = vmatprep.subr.mxu0 0.0
      %362 = vmatpush1.msra.mxu0 %v354
      %363 = vmatprep.subr.mxu0 0.0
      %364 = vmatpush1.msra.mxu0 %v355
      %365 = vmatprep.subr.mxu0 0.0
      %366 = vmatpush1.msra.mxu0 %v356
      %367 = vmatprep.subr.mxu0 0.0
      %368 = vmatpush1.msra.mxu0 %v357
      %369 = vmatprep.subr.mxu0 0.0
      %370 = vmatpush1.msra.mxu0 0.0
      %371 = vmatprep.subr.mxu0 0.0
      %372 = vmatpush1.msra.mxu0 0.0
      %373 = vmatprep.subr.mxu0 0.0
      %374 = vmatpush1.msra.mxu0 0.0
      %375 = vmatprep.subr.mxu0 0.0
      %376 = vmatpush1.msra.mxu0 0.0
      %377 = vmatprep.subr.mxu0 0.0
      %378 = vmatpush1.msra.mxu0 0.0
      %379 = vmatprep.subr.mxu0 0.0
      %380 = vmatpush1.msra.mxu0 0.0
      %381 = vmatprep.subr.mxu0 0.0
      %382 = vmatpush1.msra.mxu0 0.0
      %383 = vmatprep.subr.mxu0 0.0
      %384 = vmatpush1.msra.mxu0 0.0
      %385 = vmatprep.subr.mxu0 0.0
      %386 = vmatpush1.msra.mxu0 0.0
      %387 = vmatprep.subr.mxu0 0.0
      %388 = vmatpush1.msra.mxu0 0.0
      %389 = vmatprep.subr.mxu0 0.0
      %390 = vmatpush1.msra.mxu0 0.0
      %391 = vmatprep.subr.mxu0 0.0
      %392 = vmatpush1.msra.mxu0 0.0
      %393 = vmatprep.subr.mxu0 0.0
      %394 = vmatpush1.msra.mxu0 0.0
      %395 = vmatprep.subr.mxu0 0.0
      %396 = vmatpush1.msra.mxu0 0.0
      %397 = vmatprep.subr.mxu0 0.0
      %398 = vmatpush1.msra.mxu0 0.0
      %399 = vmatprep.subr.mxu0 0.0
      %400 = vmatpush1.msra.mxu0 0.0
      %401 = vmatprep.subr.mxu0 0.0
      %402 = vmatpush1.msra.mxu0 0.0
      %403 = vmatprep.subr.mxu0 0.0
      %404 = vmatpush1.msra.mxu0 0.0
      %405 = vmatprep.subr.mxu0 0.0
      %406 = vmatpush1.msra.mxu0 0.0
      %407 = vmatprep.subr.mxu0 0.0
      %408 = vmatpush1.msra.mxu0 0.0
      %409 = vmatprep.subr.mxu0 0.0
      %410 = vmatpush1.msra.mxu0 0.0
      %411 = vmatprep.subr.mxu0 0.0
      %412 = vmatpush1.msra.mxu0 0.0
      %413 = vmatprep.subr.mxu0 0.0
      %414 = vmatpush1.msra.mxu0 0.0
      %415 = vmatprep.subr.mxu0 0.0
      %416 = vmatpush1.msra.mxu0 0.0
      %417 = vmatprep.subr.mxu0 0.0
      %418 = vmatpush1.msra.mxu0 0.0
      %419 = vmatprep.subr.mxu0 0.0
      %420 = vmatpush1.msra.mxu0 0.0
      %421 = vmatprep.subr.mxu0 0.0
      %422 = vmatpush1.msra.mxu0 0.0
      %423 = vmatprep.subr.mxu0 0.0
      %424 = vmatpush1.msra.mxu0 0.0
      %425 = vmatprep.mubr.f32.mxu0 0.0
      %426 = vmatmul.mubr.f32.gmra.mrb[0].mxu0 %v359
      %v427 = vpop.f32.mrb[0].mxu0
      %v428 = vadd.f32 0.0, %v427
      %v429 = vpop.f32.mrb[0].mxu0
      %430 = vdwg.mxu0
      %v431 = vmul.f32 %v428, 0.015625
      %v432 = vld [vmem:[#allocation8] sm:$0x1]
      %v434 = vlaneseq
      %v435 = vshrl.u32 %v434, 7
      %v436 = vsub.s32 0, %v435
      %v437 = vrot.slane %v432, %v436
      %v439 = vadd.f32 %v431, %v437
      %v440 = vmul.f32 %v439, 0.5
      %v441 = vmul.f32 %v439, 0.70710677
      %v442 = verf.f32.pop %v441
      %v443 = vadd.f32 %v442, 1.0
      %v444 = vmul.f32 %v440, %v443
      %v445 = vld [vmem:[#allocation9] sm:$0xff]
      %v446 = vld [vmem:[#allocation9 + $0x8] sm:$0xff]
      %v447 = vld [vmem:[#allocation9 + $0x10] sm:$0xff]
      %v448 = vld [vmem:[#allocation9 + $0x18] sm:$0xff]
      %v449 = vld [vmem:[#allocation9 + $0x20] sm:$0xff]
      %v450 = vld [vmem:[#allocation9 + $0x28] sm:$0xff]
      %v451 = vld [vmem:[#allocation9 + $0x30] sm:$0xff]
      %v452 = vld [vmem:[#allocation9 + $0x38] sm:$0xff]
      %v453 = vld [vmem:[#allocation9 + $0x40] sm:$0xff]
      %v454 = vld [vmem:[#allocation9 + $0x48] sm:$0xff]
      %v455 = vld [vmem:[#allocation9 + $0x50] sm:$0xff]
      %v456 = vld [vmem:[#allocation9 + $0x58] sm:$0xff]
      %v457 = vld [vmem:[#allocation9 + $0x60] sm:$0xff]
      %v458 = vld [vmem:[#allocation9 + $0x68] sm:$0xff]
      %v459 = vld [vmem:[#allocation9 + $0x70] sm:$0xff]
      %v460 = vld [vmem:[#allocation9 + $0x78] sm:$0xff]
      %v461 = vld [vmem:[#allocation11] sm:$0x1]
      %v463 = vlaneseq
      %v464 = vshrl.u32 %v463, 7
      %v465 = vsub.s32 0, %v464
      %v466 = vrot.slane %v461, %v465
      %468 = vmatprep.subr.mxu0 0.0
      %469 = vmatpush1.msra.mxu0 %v445
      %470 = vmatprep.subr.mxu0 0.0
      %471 = vmatpush1.msra.mxu0 %v446
      %472 = vmatprep.subr.mxu0 0.0
      %473 = vmatpush1.msra.mxu0 %v447
      %474 = vmatprep.subr.mxu0 0.0
      %475 = vmatpush1.msra.mxu0 %v448
      %476 = vmatprep.subr.mxu0 0.0
      %477 = vmatpush1.msra.mxu0 %v449
      %478 = vmatprep.subr.mxu0 0.0
      %479 = vmatpush1.msra.mxu0 %v450
      %480 = vmatprep.subr.mxu0 0.0
      %481 = vmatpush1.msra.mxu0 %v451
      %482 = vmatprep.subr.mxu0 0.0
      %483 = vmatpush1.msra.mxu0 %v452
      %484 = vmatprep.subr.mxu0 0.0
      %485 = vmatpush1.msra.mxu0 %v453
      %486 = vmatprep.subr.mxu0 0.0
      %487 = vmatpush1.msra.mxu0 %v454
      %488 = vmatprep.subr.mxu0 0.0
      %489 = vmatpush1.msra.mxu0 %v455
      %490 = vmatprep.subr.mxu0 0.0
      %491 = vmatpush1.msra.mxu0 %v456
      %492 = vmatprep.subr.mxu0 0.0
      %493 = vmatpush1.msra.mxu0 %v457
      %494 = vmatprep.subr.mxu0 0.0
      %495 = vmatpush1.msra.mxu0 %v458
      %496 = vmatprep.subr.mxu0 0.0
      %497 = vmatpush1.msra.mxu0 %v459
      %498 = vmatprep.subr.mxu0 0.0
      %499 = vmatpush1.msra.mxu0 %v460
      %500 = vmatprep.subr.mxu0 0.0
      %501 = vmatpush1.msra.mxu0 0.0
      %502 = vmatprep.subr.mxu0 0.0
      %503 = vmatpush1.msra.mxu0 0.0
      %504 = vmatprep.subr.mxu0 0.0
      %505 = vmatpush1.msra.mxu0 0.0
      %506 = vmatprep.subr.mxu0 0.0
      %507 = vmatpush1.msra.mxu0 0.0
      %508 = vmatprep.subr.mxu0 0.0
      %509 = vmatpush1.msra.mxu0 0.0
      %510 = vmatprep.subr.mxu0 0.0
      %511 = vmatpush1.msra.mxu0 0.0
      %512 = vmatprep.subr.mxu0 0.0
      %513 = vmatpush1.msra.mxu0 0.0
      %514 = vmatprep.subr.mxu0 0.0
      %515 = vmatpush1.msra.mxu0 0.0
      %516 = vmatprep.subr.mxu0 0.0
      %517 = vmatpush1.msra.mxu0 0.0
      %518 = vmatprep.subr.mxu0 0.0
      %519 = vmatpush1.msra.mxu0 0.0
      %520 = vmatprep.subr.mxu0 0.0
      %521 = vmatpush1.msra.mxu0 0.0
      %522 = vmatprep.subr.mxu0 0.0
      %523 = vmatpush1.msra.mxu0 0.0
      %524 = vmatprep.subr.mxu0 0.0
      %525 = vmatpush1.msra.mxu0 0.0
      %526 = vmatprep.subr.mxu0 0.0
      %527 = vmatpush1.msra.mxu0 0.0
      %528 = vmatprep.subr.mxu0 0.0
      %529 = vmatpush1.msra.mxu0 0.0
      %530 = vmatprep.subr.mxu0 0.0
      %531 = vmatpush1.msra.mxu0 0.0
      %532 = vmatprep.mubr.f32.mxu0 0.0
      %533 = vmatmul.mubr.f32.gmra.mrb[0].mxu0 %v444
      %v534 = vpop.f32.mrb[0].mxu0
      %v535 = vadd.f32 %v466, %v534
      %v536 = vpop.f32.mrb[0].mxu0
      %537 = vdwg.mxu0
      %538 = vst [vmem:[#allocation12] sm:$0xff] %v535
    $region49: #{text_emotion_model_forward.1} parent=1 // pred_fallthru
      _
    // Predicated region
    $region50: #{text_emotion_model_forward.1} parent=1 // pred_check
      _
    $region51: #{text_emotion_model_forward.1} parent=1 // pred_check_branch
      %540 = sbr.rel (0) target = $region53
    $region52: #{text_emotion_model_forward.1} parent=1 // pred_region
      %s542 = ssub.s32 128, 128
      %543 = vsyncadd [#allocation5], %s542
      %s545 = sshll.u32 [#allocation12], 4
      %s546 = int_to_ptr.vmem [resolvable:$true] %s545
      %548 = dma.vmem_to_hbm [thread:$0]  %s546, 128, %s5, [#allocation5]
    $region53: #{text_emotion_model_forward.1} parent=1 // pred_fallthru
      _
    // Predicated region
    $region54: #{text_emotion_model_forward.1} parent=1 // pred_check
      _
    $region55: #{text_emotion_model_forward.1} parent=1 // pred_check_branch
      %550 = sbr.rel (0) target = $region57
    $region56: #{text_emotion_model_forward.1} parent=1 // pred_region
      %551 = dma.done [#allocation5], 128
    $region57: #{text_emotion_model_forward.1} parent=1 // pred_fallthru
      _
    %552 = vsyncpa [#allocation4], 1
    %553 = vsyncpa [#allocation7], 1
    %554 = vsyncpa [#allocation10], 1
    %555 = vsyncpa [#allocation5], 1

</llo_original>
